<compile_context>
chip_gen: v6e
topology: v6e:2x2x1
jax: 0.10.0
libtpu: 0.0.40
codegen_flags: <defaults>
</compile_context>

<pallas_src>
import functools

import jax
import jax.numpy as jnp
from jax.experimental import pallas as pl
from jax.experimental.pallas import tpu as pltpu


def _round_up(x, m):
    return (x + m - 1) // m * m


def _num_tiles(m, t):
    return _round_up(m, t) // t


def _device_vmem_bytes():
    """Physical VMEM of the attached TPU; conservative fallback if unknown."""
    try:
        info = pltpu.get_tpu_info()
        v = int(info.vmem_capacity_bytes)
        if v > 0:
            return v
    except Exception:
        pass
    return 64 << 20  # conservative (v7x per-TC size)


# --------------------------------------------------------------------------- #
# Kernel
# --------------------------------------------------------------------------- #
def _ffn_kernel(x_ref, w13_ref, w2_ref, o_ref, acc_ref, *, tn):
    """One (row-tile, hidden-tile) grid step.

    x_ref   : (tm, dim)        compute dtype (bf16)
    w13_ref : (dim, 2*tn)      fused [w1_blk | w3_blk] slab, compute dtype
    w2_ref  : (tn, dim)        down-projection slab, compute dtype
    o_ref   : (tm, dim)        output dtype
    acc_ref : (tm, dim) f32    VMEM accumulator over hidden tiles
    """
    j = pl.program_id(1)

    @pl.when(j == 0)
    def _():
        acc_ref[...] = jnp.zeros_like(acc_ref)

    x = x_ref[...]                                                   # (tm, dim)

    # Fused gate matmuls: one MXU stream over the (dim, 2*tn) slab.
    h13 = jnp.dot(x, w13_ref[...], preferred_element_type=jnp.float32)
    h1 = h13[:, :tn]
    h3 = h13[:, tn:]
    h = (h1 * jax.nn.sigmoid(h1)) * h3                               # SwiGLU, f32

    # Partial down-projection for this hidden tile, accumulated in f32.
    # Keep this a single `acc += dot` (no extra elementwise on the result
    # path) so the MXU result buffer can accumulate in place on v7x.
    acc_ref[...] += jnp.dot(h.astype(x.dtype), w2_ref[...],
                            preferred_element_type=jnp.float32)

    @pl.when(j == pl.num_programs(1) - 1)
    def _():
        o_ref[...] = acc_ref[...].astype(o_ref.dtype)


# --------------------------------------------------------------------------- #
# Tile selection (device aware)
# --------------------------------------------------------------------------- #
def _select_tn(dim, hidden, compute_dtype, vmem_bytes):
    """Hidden-axis tile: largest of {512,256,128} whose double-buffered
    weight slabs fit comfortably in the device VMEM."""
    isz = jnp.dtype(compute_dtype).itemsize
    tn = 512
    # Double-buffered [w1|w3] slab (dim x 2tn) + w2 slab (tn x dim).
    while tn > 128 and 2 * (3 * dim * tn) * isz > 0.5 * vmem_bytes:
        tn //= 2
    tn = min(tn, _round_up(hidden, 128))
    return max(tn, 128)


def _select_tm(m, dim, tn, compute_dtype, out_dtype, vmem_bytes, tm_max=1024):
    """Row tile: largest power-of-two <= tm_max whose x/out/acc tiles fit the
    remaining VMEM budget; clamped / megacore-split for small M."""
    isz = jnp.dtype(compute_dtype).itemsize
    osz = jnp.dtype(out_dtype).itemsize
    sublane = 16 if isz < 4 else 8

    slab_bytes = 2 * (dim * 2 * tn + tn * dim) * isz     # double-buffered weights
    headroom = 4 << 20                                   # Mosaic internal scratch
    budget = int(vmem_bytes * 0.85) - slab_bytes - headroom
    per_row = dim * (2 * isz + 2 * osz + 4)              # x(2x) + out(2x) + acc f32

    tm = tm_max
    while tm > 128 and tm * per_row > budget:
        tm //= 2
    tm = max(tm, sublane)

    # Small-M clamp, rounded to the packed-sublane multiple.
    tm = min(tm, _round_up(m, sublane))
    tm = _round_up(tm, sublane)

    # Megacore: make sure the parallel (row) axis has >= 2 tiles when the
    # data allows it, so both TensorCores get work on v7x.
    while (_num_tiles(m, tm) < 2 and tm > sublane
           and (tm // 2) % sublane == 0 and _num_tiles(m, tm // 2) >= 2):
        tm //= 2
    return tm


# --------------------------------------------------------------------------- #
# One-time parameter preparation (do NOT call per forward pass)
# --------------------------------------------------------------------------- #
def pack_ffn_weights(w1, w2, w3, *, tn=None, compute_dtype=jnp.bfloat16):
    """PyTorch-layout weights -> kernel layout.

    w1, w3: (hidden, dim)   w2: (dim, hidden)
    Returns (w13_packed (dim, nH*2*tn), w2t (Hpad, dim), tn).
    Hidden is zero-padded to a multiple of tn; tn is a multiple of 128.
    """
    hidden, dim = w1.shape
    if tn is None:
        tn = _select_tn(dim, hidden, compute_dtype, _device_vmem_bytes())
    tn = min(tn, _round_up(hidden, 128))
    hpad = _round_up(hidden, tn)
    n_h = hpad // tn

    pad_h = ((0, hpad - hidden), (0, 0))
    w1p = jnp.pad(w1, pad_h).astype(compute_dtype)          # (Hpad, dim)
    w3p = jnp.pad(w3, pad_h).astype(compute_dtype)          # (Hpad, dim)
    w2p = jnp.pad(w2, ((0, 0), (0, hpad - hidden))).astype(compute_dtype)

    # Interleave per-tile blocks of w1^T and w3^T so each grid step reads one
    # contiguous (dim, 2*tn) slab: [w1_blk_j | w3_blk_j].
    w1t = w1p.T.reshape(dim, n_h, tn)
    w3t = w3p.T.reshape(dim, n_h, tn)
    w13 = jnp.concatenate([w1t, w3t], axis=2).reshape(dim, n_h * 2 * tn)

    w2t = w2p.T                                              # (Hpad, dim)
    return w13, w2t, tn


# --------------------------------------------------------------------------- #
# Wrapper
# --------------------------------------------------------------------------- #
def feed_forward_pallas(x, w13, w2t, tn, *, tm=None,
                        compute_dtype=jnp.bfloat16, vmem_limit_bytes=None):
    """x: [..., dim]; (w13, w2t, tn) from pack_ffn_weights."""
    orig_shape = x.shape
    dim = orig_shape[-1]
    hpad = w2t.shape[0]
    n_h = hpad // tn

    x2d = x.reshape(-1, dim)
    m = x2d.shape[0]

    phys_vmem = _device_vmem_bytes()
    if tm is None:
        tm = _select_tm(m, dim, tn, compute_dtype, x.dtype, phys_vmem)
    mpad = _round_up(m, tm)
    if mpad != m:
        x2d = jnp.pad(x2d, ((0, mpad - m), (0, 0)))
    xc = x2d.astype(compute_dtype)

    n_row_tiles = mpad // tm
    grid = (n_row_tiles, n_h)

    # VMEM budget: double-buffered I/O tiles + resident f32 accumulator,
    # capped at 90% of the physical device VMEM.
    isz = jnp.dtype(compute_dtype).itemsize
    osz = jnp.dtype(x.dtype).itemsize
    needed = (2 * (tm * dim * isz            # x tile
                   + dim * 2 * tn * isz      # fused w1/w3 slab
                   + tn * dim * isz          # w2 slab
                   + tm * dim * osz)         # output tile
              + tm * dim * 4                 # f32 accumulator
              + (2 << 20))                   # headroom
    if vmem_limit_bytes is None:
        vmem_limit_bytes = int(min(max(needed, 16 << 20),
                                   int(phys_vmem * 0.9)))

    # Honest roofline: weights are re-streamed once per ROW tile.
    flops = 2 * mpad * dim * 2 * hpad + 2 * mpad * hpad * dim
    bytes_accessed = (xc.size * isz
                      + (w13.size + w2t.size) * isz * n_row_tiles
                      + mpad * dim * osz)
    cost = pl.CostEstimate(flops=int(flops),
                           transcendentals=int(mpad * hpad),
                           bytes_accessed=int(bytes_accessed))

    # NOTE: weight slabs keep the default pipeline depth (2).  Raise via
    # pipeline_mode=pl.Buffered(3) only if profiling shows exposed DMA gaps
    # and the device has the VMEM headroom (i.e. not v7x at tn=512, big dim).
    out = pl.pallas_call(
        functools.partial(_ffn_kernel, tn=tn),
        out_shape=jax.ShapeDtypeStruct((mpad, dim), x.dtype),
        grid_spec=pltpu.PrefetchScalarGridSpec(
            num_scalar_prefetch=0,
            grid=grid,
            in_specs=[
                pl.BlockSpec((tm, dim), lambda i, j: (i, 0)),       # x rows
                pl.BlockSpec((dim, 2 * tn), lambda i, j: (0, j)),   # [w1|w3] slab
                pl.BlockSpec((tn, dim), lambda i, j: (j, 0)),       # w2 slab
            ],
            out_specs=pl.BlockSpec((tm, dim), lambda i, j: (i, 0)),
            scratch_shapes=[pltpu.VMEM((tm, dim), jnp.float32)],
        ),
        compiler_params=pltpu.CompilerParams(
            dimension_semantics=("parallel", "arbitrary"),
            vmem_limit_bytes=vmem_limit_bytes),
        cost_estimate=cost,
    )(xc, w13, w2t)

    return out[:m].reshape(orig_shape)


# --------------------------------------------------------------------------- #
# Reference / demo
# --------------------------------------------------------------------------- #
def _compute_hidden_dim(dim, hidden_dim, multiple_of, ffn_dim_multiplier):
    hidden_dim = int(2 * hidden_dim / 3)
    if ffn_dim_multiplier is not None:
        hidden_dim = int(ffn_dim_multiplier * hidden_dim)
    hidden_dim = multiple_of * ((hidden_dim + multiple_of - 1) // multiple_of)
    return hidden_dim


def _trunc_normal(key, shape, std):
    return std * jax.random.truncated_normal(key, -2.0, 2.0, shape, jnp.float32)


if __name__ == "__main__":
    # Small config: dim=64, hidden_dim=96, multiple_of=32 -> hidden = 64
    dim, hidden_dim_arg, multiple_of, ffn_mult = 64, 96, 32, None
    hidden = _compute_hidden_dim(dim, hidden_dim_arg, multiple_of, ffn_mult)

    batch, seq = 2, 8
    key = jax.random.PRNGKey(0)
    kx, k1, k2, k3 = jax.random.split(key, 4)

    x = jax.random.normal(kx, (batch, seq, dim), jnp.float32)
    init_std = 0.02
    w1 = _trunc_normal(k1, (hidden, dim), 0.02)       # nn.Linear(dim, hidden).weight
    w2 = _trunc_normal(k2, (dim, hidden), init_std)   # nn.Linear(hidden, dim).weight
    w3 = _trunc_normal(k3, (hidden, dim), init_std)   # nn.Linear(dim, hidden).weight

    # Pure-JAX reference (f32).
    def ref(x):
        h1 = x @ w1.T
        h3 = x @ w3.T
        return (jax.nn.silu(h1) * h3) @ w2.T

    expected = ref(x)

    # 1) f32 compute path: exact check.
    w13_f32, w2t_f32, tn_f32 = pack_ffn_weights(w1, w2, w3,
                                                compute_dtype=jnp.float32)
    out_f32 = feed_forward_pallas(x, w13_f32, w2t_f32, tn_f32,
                                  compute_dtype=jnp.float32)
    jax.block_until_ready(out_f32)
    assert out_f32.shape == x.shape
    assert jnp.allclose(out_f32, expected, atol=1e-5, rtol=1e-5), \
        "f32 path mismatch vs reference"

    # 2) bf16 compute path (production config): loose tolerance vs f32 ref.
    w13_bf, w2t_bf, tn_bf = pack_ffn_weights(w1, w2, w3,
                                             compute_dtype=jnp.bfloat16)
    out_bf = feed_forward_pallas(x, w13_bf, w2t_bf, tn_bf,
                                 compute_dtype=jnp.bfloat16)
    jax.block_until_ready(out_bf)
    assert out_bf.shape == x.shape
    assert jnp.allclose(out_bf, expected, atol=1e-3, rtol=5e-2), \
        "bf16 path mismatch vs reference"

    print("KERNEL_OK")
</pallas_src>

<mosaic_0001>
module attributes {stable_mosaic.version = 11 : i64} {
  func.func @_ffn_kernel(%arg0: i32, %arg1: i32, %arg2: memref<8x64xf32, #tpu.memory_space<vmem>>, %arg3: memref<64x256xf32, #tpu.memory_space<vmem>>, %arg4: memref<128x64xf32, #tpu.memory_space<vmem>>, %arg5: memref<8x64xf32, #tpu.memory_space<vmem>>, %arg6: memref<8x64xf32, #tpu.memory_space<vmem>>) attributes {dimension_semantics = [#tpu.dimension_semantics<parallel>, #tpu.dimension_semantics<arbitrary>], iteration_bounds = array<i64: 2, 1>, scalar_prefetch = 0 : i64, scratch_operands = 1 : i64, tpu.core_type = #tpu.core_type<tc>, window_params = [{transform_indices = @transform_0, window_bounds = array<i64: 8, 64>}, {transform_indices = @transform_1, window_bounds = array<i64: 64, 256>}, {transform_indices = @transform_2, window_bounds = array<i64: 128, 64>}, {transform_indices = @transform_3, window_bounds = array<i64: 8, 64>}]} {
    %c0_i32 = arith.constant 0 : i32
    %0 = arith.cmpi eq, %arg1, %c0_i32 : i32
    %1 = arith.extui %0 : i1 to i32
    %c0_i32_0 = arith.constant 0 : i32
    %2 = arith.cmpi ne, %1, %c0_i32_0 : i32
    scf.if %2 {
      %cst_14 = arith.constant 0.000000e+00 : f32
      %23 = vector.broadcast %cst_14 : f32 to vector<8x64xf32>
      %c0_15 = arith.constant 0 : index
      %c0_16 = arith.constant 0 : index
      %24 = vector.load %arg6[%c0_15, %c0_16] : memref<8x64xf32, #tpu.memory_space<vmem>>, vector<8x64xf32>
      tpu.vector_store %arg6[%c0_15, %c0_16], %23 {strides = array<i32>} : memref<8x64xf32, #tpu.memory_space<vmem>>, vector<8x64xf32>,
    } else {
    }
    %c0 = arith.constant 0 : index
    %c0_1 = arith.constant 0 : index
    %3 = vector.load %arg2[%c0, %c0_1] : memref<8x64xf32, #tpu.memory_space<vmem>>, vector<8x64xf32>
    %c0_2 = arith.constant 0 : index
    %c0_3 = arith.constant 0 : index
    %4 = vector.load %arg3[%c0_2, %c0_3] : memref<64x256xf32, #tpu.memory_space<vmem>>, vector<64x256xf32>
    %cst = arith.constant dense<0.000000e+00> : vector<8x256xf32>
    %5 = tpu.matmul %3, %4, %cst {dimension_numbers = #tpu.dot_dimension_numbers<[1], [0], [0], [1], [0, 0, 1, 1], [], []>} : vector<8x64xf32>, vector<64x256xf32>, vector<8x256xf32> -> vector<8x256xf32>
    %6 = vector.extract_strided_slice %5 {offsets = [0, 0], sizes = [8, 128], strides = [1, 1]} : vector<8x256xf32> to vector<8x128xf32>
    %7 = vector.extract_strided_slice %5 {offsets = [0, 128], sizes = [8, 128], strides = [1, 1]} : vector<8x256xf32> to vector<8x128xf32>
    %8 = arith.negf %6 : vector<8x128xf32>
    %9 = math.exp %8 : vector<8x128xf32>
    %cst_4 = arith.constant 1.000000e+00 : f32
    %10 = vector.broadcast %cst_4 : f32 to vector<8x128xf32>
    %11 = arith.addf %10, %9 : vector<8x128xf32>
    %12 = arith.divf %10, %11 : vector<8x128xf32>
    %13 = arith.mulf %6, %12 : vector<8x128xf32>
    %14 = arith.mulf %13, %7 : vector<8x128xf32>
    %c0_5 = arith.constant 0 : index
    %c0_6 = arith.constant 0 : index
    %15 = vector.load %arg6[%c0_5, %c0_6] : memref<8x64xf32, #tpu.memory_space<vmem>>, vector<8x64xf32>
    %c0_7 = arith.constant 0 : index
    %c0_8 = arith.constant 0 : index
    %16 = vector.load %arg4[%c0_7, %c0_8] : memref<128x64xf32, #tpu.memory_space<vmem>>, vector<128x64xf32>
    %cst_9 = arith.constant dense<0.000000e+00> : vector<8x64xf32>
    %17 = tpu.matmul %14, %16, %cst_9 {dimension_numbers = #tpu.dot_dimension_numbers<[1], [0], [0], [1], [0, 0, 1, 1], [], []>} : vector<8x128xf32>, vector<128x64xf32>, vector<8x64xf32> -> vector<8x64xf32>
    %18 = arith.addf %15, %17 : vector<8x64xf32>
    %c0_10 = arith.constant 0 : index
    %c0_11 = arith.constant 0 : index
    %19 = vector.load %arg6[%c0_10, %c0_11] : memref<8x64xf32, #tpu.memory_space<vmem>>, vector<8x64xf32>
    tpu.vector_store %arg6[%c0_10, %c0_11], %18 {strides = array<i32>} : memref<8x64xf32, #tpu.memory_space<vmem>>, vector<8x64xf32>,
    %c0_i32_12 = arith.constant 0 : i32
    %20 = arith.cmpi eq, %arg1, %c0_i32_12 : i32
    %21 = arith.extui %20 : i1 to i32
    %c0_i32_13 = arith.constant 0 : i32
    %22 = arith.cmpi ne, %21, %c0_i32_13 : i32
    scf.if %22 {
      %c0_14 = arith.constant 0 : index
      %c0_15 = arith.constant 0 : index
      %23 = vector.load %arg6[%c0_14, %c0_15] : memref<8x64xf32, #tpu.memory_space<vmem>>, vector<8x64xf32>
      %c0_16 = arith.constant 0 : index
      %c0_17 = arith.constant 0 : index
      %24 = vector.load %arg5[%c0_16, %c0_17] : memref<8x64xf32, #tpu.memory_space<vmem>>, vector<8x64xf32>
      tpu.vector_store %arg5[%c0_16, %c0_17], %23 {strides = array<i32>} : memref<8x64xf32, #tpu.memory_space<vmem>>, vector<8x64xf32>,
    } else {
    }
    return
  }
  func.func @transform_0(%arg0: i32, %arg1: i32) -> (i32, i32) {
    %c0_i32 = arith.constant 0 : i32
    %c0_i32_0 = arith.constant 0 : i32
    return %arg0, %c0_i32 : i32, i32
  }
  func.func @transform_1(%arg0: i32, %arg1: i32) -> (i32, i32) {
    %c0_i32 = arith.constant 0 : i32
    %c0_i32_0 = arith.constant 0 : i32
    return %c0_i32, %arg1 : i32, i32
  }
  func.func @transform_2(%arg0: i32, %arg1: i32) -> (i32, i32) {
    %c0_i32 = arith.constant 0 : i32
    %c0_i32_0 = arith.constant 0 : i32
    return %arg1, %c0_i32 : i32, i32
  }
  func.func @transform_3(%arg0: i32, %arg1: i32) -> (i32, i32) {
    %c0_i32 = arith.constant 0 : i32
    %c0_i32_0 = arith.constant 0 : i32
    return %arg0, %c0_i32 : i32, i32
  }
}

</mosaic_0001>

<llo_original>
// kernel: tpu_custom_call.1
$region0: #{tpu_custom_call.1}
  #allocation0 [shape = 'u32[]', space=smem, size = 0x4, offset = 0x4, fixed_abs, tag = 'smem constant byte address 0x4 - core index']
  #allocation1 [shape = 'u32[144,128]{1,0:T(1,128)}', space=vmem, size = 0x12000, scoped, tag = 'internal scratch']
  #allocation2 [shape = 'f32[8,64]{1,0:T(8,128)}', space=vmem, size = 0x1000, scoped, tag = 'scratch operand']
  %s0 = inlined_call_operand.vmem [shape: f32[16,64], index: 0, kind: input, shape index: {}]
  %s1 = inlined_call_operand.vmem [shape: f32[64,256], index: 1, kind: input, shape index: {}]
  %s2 = inlined_call_operand.vmem [shape: f32[128,64], index: 2, kind: input, shape index: {}]
  %s3 = inlined_call_operand.hbm [shape: f32[16,64], index: 3, kind: output, shape index: {}]
  %s4 = sld [smem:[#allocation0]]
  $region53: #{tpu_custom_call.1} parent=0
    _
  %s6 = ssub.s32 1, %s4
  %s7 = scalar_select 0, %s6, %s4
  $region1: #{tpu_custom_call.1} parent=0
    #allocation3 [shape = 'u8[8192]{0}', space=vmem, size = 0x2000, scoped, tag = 'output window, operand 0']
    #allocation4 [shape = 's32[2]{0}', space=sflag, size = 0x8, scoped, tag = 'scoped memory for tpu_custom_call.1']
    %8 = vsyncpa [#allocation4], 0
    %s9 = scalar_lea.sflag [#allocation4], 1
    %10 = vsyncpa %s9, 0
    loop: start=0, step=1, limit=4
    $region2: #{tpu_custom_call.1} parent=1 // loop_pre_header
      _
    $region3: #{tpu_custom_call.1} parent=1 // loop_header
      %s12 = sphi 0, %s16
      %p13 = scmp.ge.s32.totalorder %s12, 4
      %s19 = sphi 0, %s31
      %s20 = sphi 0, %s27
      %s21 = sphi 0, %s19
      %s22 = sphi 0, %s20
      %s23 = sphi 0, %s21
      %s24 = sphi 0, %s22
      %s34 = sphi 0, %s36
      %s37 = sphi 0, %s34
      %s38 = sphi 0, %s37
      %s54 = sphi 0, %s38
      %s60 = sphi 0, %s62
      %s63 = sphi 0, %s60
      %s64 = sphi 0, %s63
      %s80 = sphi 0, %s64
      %s86 = sphi 0, %s88
      %s89 = sphi 0, %s86
      %s90 = sphi 0, %s89
      %s106 = sphi 0, %s90
      %s112 = sphi 0, %s114
      %s115 = sphi 0, %s112
      %s116 = sphi 0, %s115
      %s132 = sphi 0, %s116
    $region4: #{tpu_custom_call.1} parent=1 // loop_header_branch
      %15 = sbr.rel (%p13) target = $region8
    $region5: #{tpu_custom_call.1} parent=1 // loop_body
      %s17 = ssub.s32 %s12, 1
      %s18 = ssub.s32 %s12, 2
      %s25 = sadd.s32 1, %s20
      %p26 = scmp.ge.s32.totalorder %s25, 1
      %s27 = scalar_select %p26, 0, %s25
      %s28 = sadd.s32 1, %s19
      %s29 = scalar_select %p26, %s28, %s19
      %p30 = scmp.ge.s32.totalorder %s29, 2
      %s31 = scalar_select %p30, 0, %s29
      %s32 = ssub.s32 %s19, %s31
      %p33 = scmp.eq.s32.totalorder %s32, 0
      %s35 = sadd.s32 %s34, 1
      %s36 = scalar_select %p33, %s34, %s35
      %p39 = pneg %p33
      %p40 = scmp.eq.s32.totalorder %s12, 1
      %p41 = por %p39, %p40
      %p42 = scmp.ne.s32.totalorder %s34, %s37
      %p43 = scmp.eq.s32.totalorder %s12, 0
      %p44 = por %p42, %p43
      %p45 = scmp.ne.s32.totalorder %s34, %s37
      %p46 = scmp.eq.s32.totalorder %s17, 1
      %p47 = por %p45, %p46
      %p48 = scmp.ne.s32.totalorder %s37, %s38
      %p49 = scmp.eq.s32.totalorder %s17, 0
      %p50 = por %p48, %p49
      %p51 = scmp.ne.s32.totalorder %s37, %s38
      %p52 = scmp.eq.s32.totalorder %s18, 1
      %p53 = por %p51, %p52
      %p55 = scmp.ne.s32.totalorder %s38, %s54
      %p56 = scmp.eq.s32.totalorder %s18, 0
      %p57 = por %p55, %p56
      %s58 = ssub.s32 %s20, %s27
      %p59 = scmp.eq.s32.totalorder %s58, 0
      %s61 = sadd.s32 %s60, 1
      %s62 = scalar_select %p59, %s60, %s61
      %p65 = pneg %p59
      %p66 = scmp.eq.s32.totalorder %s12, 1
      %p67 = por %p65, %p66
      %p68 = scmp.ne.s32.totalorder %s60, %s63
      %p69 = scmp.eq.s32.totalorder %s12, 0
      %p70 = por %p68, %p69
      %p71 = scmp.ne.s32.totalorder %s60, %s63
      %p72 = scmp.eq.s32.totalorder %s17, 1
      %p73 = por %p71, %p72
      %p74 = scmp.ne.s32.totalorder %s63, %s64
      %p75 = scmp.eq.s32.totalorder %s17, 0
      %p76 = por %p74, %p75
      %p77 = scmp.ne.s32.totalorder %s63, %s64
      %p78 = scmp.eq.s32.totalorder %s18, 1
      %p79 = por %p77, %p78
      %p81 = scmp.ne.s32.totalorder %s64, %s80
      %p82 = scmp.eq.s32.totalorder %s18, 0
      %p83 = por %p81, %p82
      %s84 = ssub.s32 %s20, %s27
      %p85 = scmp.eq.s32.totalorder %s84, 0
      %s87 = sadd.s32 %s86, 1
      %s88 = scalar_select %p85, %s86, %s87
      %p91 = pneg %p85
      %p92 = scmp.eq.s32.totalorder %s12, 1
      %p93 = por %p91, %p92
      %p94 = scmp.ne.s32.totalorder %s86, %s89
      %p95 = scmp.eq.s32.totalorder %s12, 0
      %p96 = por %p94, %p95
      %p97 = scmp.ne.s32.totalorder %s86, %s89
      %p98 = scmp.eq.s32.totalorder %s17, 1
      %p99 = por %p97, %p98
      %p100 = scmp.ne.s32.totalorder %s89, %s90
      %p101 = scmp.eq.s32.totalorder %s17, 0
      %p102 = por %p100, %p101
      %p103 = scmp.ne.s32.totalorder %s89, %s90
      %p104 = scmp.eq.s32.totalorder %s18, 1
      %p105 = por %p103, %p104
      %p107 = scmp.ne.s32.totalorder %s90, %s106
      %p108 = scmp.eq.s32.totalorder %s18, 0
      %p109 = por %p107, %p108
      %s110 = ssub.s32 %s19, %s31
      %p111 = scmp.eq.s32.totalorder %s110, 0
      %s113 = sadd.s32 %s112, 1
      %s114 = scalar_select %p111, %s112, %s113
      %p117 = pneg %p111
      %p118 = scmp.eq.s32.totalorder %s12, 1
      %p119 = por %p117, %p118
      %p120 = scmp.ne.s32.totalorder %s112, %s115
      %p121 = scmp.eq.s32.totalorder %s12, 0
      %p122 = por %p120, %p121
      %p123 = scmp.ne.s32.totalorder %s112, %s115
      %p124 = scmp.eq.s32.totalorder %s17, 1
      %p125 = por %p123, %p124
      %p126 = scmp.ne.s32.totalorder %s115, %s116
      %p127 = scmp.eq.s32.totalorder %s17, 0
      %p128 = por %p126, %p127
      %p129 = scmp.ne.s32.totalorder %s115, %s116
      %p130 = scmp.eq.s32.totalorder %s18, 1
      %p131 = por %p129, %p130
      %p133 = scmp.ne.s32.totalorder %s116, %s132
      %p134 = scmp.eq.s32.totalorder %s18, 0
      %p135 = por %p133, %p134
      %p136 = scmp.le.s32.totalorder 1, %s12
      %p137 = scmp.lt.s32.totalorder %s12, 3
      %p138 = pnand %p136, %p137
      %p139 = pneg %p138
      // Predicated region
      $region9: #{tpu_custom_call.1} parent=5 // pred_check
        _
      $region10: #{tpu_custom_call.1} parent=5 // pred_check_branch
        %141 = sbr.rel (%p138) target = $region12
      $region11: #{tpu_custom_call.1} parent=5 // pred_region
        %s142 = ssub.s32 %s12, 1
        // Predicated region
        $region13: #{tpu_custom_call.1} parent=11 // pred_check
          %p143 = pneg %p76
        $region14: #{tpu_custom_call.1} parent=11 // pred_check_branch
          %145 = sbr.rel (%p143) target = $region16
        $region15: #{tpu_custom_call.1} parent=11 // pred_region
          %s146 = smul.u32 2, %s22
          %p147 = scmp.lt.s32.totalorder %s146, 1
          %s148 = scalar_select %p147, %s146, 1
          %s149 = smul.addr %s148, 8
          %s150 = scalar_lea.vmem %s1, %s149
          %s151 = smul.u32 2, %s22
        $region16: #{tpu_custom_call.1} parent=11 // pred_fallthru
          _
        // Predicated region
        $region17: #{tpu_custom_call.1} parent=11 // pred_check
          %p152 = pneg %p102
        $region18: #{tpu_custom_call.1} parent=11 // pred_check_branch
          %154 = sbr.rel (%p152) target = $region20
        $region19: #{tpu_custom_call.1} parent=11 // pred_region
          %s155 = smul.u32 16, %s22
          %p156 = scmp.lt.s32.totalorder %s155, 15
          %s157 = scalar_select %p156, %s155, 15
          %s158 = smul.addr %s157, 8
          %s159 = scalar_lea.vmem %s2, %s158
          %s160 = smul.u32 16, %s22
        $region20: #{tpu_custom_call.1} parent=11 // pred_fallthru
          _
      $region12: #{tpu_custom_call.1} parent=5 // pred_fallthru
        _
      %p161 = scmp.lt.s32.totalorder %s12, 2
      // Predicated region
      $region21: #{tpu_custom_call.1} parent=5 // pred_check
        %p162 = pneg %p161
      $region22: #{tpu_custom_call.1} parent=5 // pred_check_branch
        %164 = sbr.rel (%p162) target = $region24
      $region23: #{tpu_custom_call.1} parent=5 // pred_region
        // Predicated region
        $region25: #{tpu_custom_call.1} parent=23 // pred_check
          %p165 = pneg %p44
        $region26: #{tpu_custom_call.1} parent=23 // pred_check_branch
          %167 = sbr.rel (%p165) target = $region28
        $region27: #{tpu_custom_call.1} parent=23 // pred_region
          %p168 = scmp.lt.s32.totalorder %s19, 1
          %s169 = scalar_select %p168, %s19, 1
          %s170 = smul.addr %s169, 8
          %s171 = scalar_lea.vmem %s0, %s170
        $region28: #{tpu_custom_call.1} parent=23 // pred_fallthru
          _
      $region24: #{tpu_custom_call.1} parent=5 // pred_fallthru
        _
      %p172 = scmp.le.s32.totalorder 1, %s12
      %p173 = scmp.lt.s32.totalorder %s12, 3
      %p174 = pnand %p172, %p173
      %p175 = pneg %p174
      // Predicated region
      $region29: #{tpu_custom_call.1} parent=5 // pred_check
        _
      $region30: #{tpu_custom_call.1} parent=5 // pred_check_branch
        %177 = sbr.rel (%p174) target = $region32
      $region31: #{tpu_custom_call.1} parent=5 // pred_region
        %s178 = ssub.s32 %s12, 1
        %p179 = scmp.lt.s32.totalorder %s21, 1
        %s180 = scalar_select %p179, %s21, 1
        %s181 = smul.addr %s180, 8
        %s182 = scalar_lea.vmem %s0, %s181
        %p183 = pneg %p50
        %p184 = pneg %p47
        %s185 = smul.u32 2, %s22
        %p186 = scmp.lt.s32.totalorder %s185, 1
        %s187 = scalar_select %p186, %s185, 1
        %s188 = smul.addr %s187, 8
        %s189 = scalar_lea.vmem %s1, %s188
        %p190 = pneg %p76
        %p191 = pneg %p73
        %s192 = smul.u32 16, %s22
        %p193 = scmp.lt.s32.totalorder %s192, 15
        %s194 = scalar_select %p193, %s192, 15
        %s195 = smul.addr %s194, 8
        %s196 = scalar_lea.vmem %s2, %s195
        %p197 = pneg %p102
        %p198 = pneg %p99
        %p199 = pneg %p128
        %p200 = pneg %p125
        %s201 = sand.u32 %s115, 1
        %s202 = scalar_lea.sflag [#allocation4], %s201
        %s203 = sand.u32 %s115, 1
        %s204 = smul.addr %s203, 8
        %s205 = scalar_lea.vmem [#allocation3], %s204
        %p206 = scmp.lt.s32.totalorder %s21, 1
        %s207 = scalar_select %p206, %s21, 1
        %s208 = smul.addr %s207, 8
        %s209 = scalar_lea.vmem %s0, %s208
        %s210 = smul.u32 2, %s22
        %p211 = scmp.lt.s32.totalorder %s210, 1
        %s212 = scalar_select %p211, %s210, 1
        %s213 = smul.addr %s212, 8
        %s214 = scalar_lea.vmem %s1, %s213
        %s215 = smul.u32 2, %s22
        %s216 = smul.u32 16, %s22
        %p217 = scmp.lt.s32.totalorder %s216, 15
        %s218 = scalar_select %p217, %s216, 15
        %s219 = smul.addr %s218, 8
        %s220 = scalar_lea.vmem %s2, %s219
        %s221 = smul.u32 16, %s22
        %p222 = scmp.eq.s32.totalorder %s22, 0
        // Predicated region
        $region33: #{tpu_custom_call.1} parent=31 // pred_check
          %p223 = pneg %p222
        $region34: #{tpu_custom_call.1} parent=31 // pred_check_branch
          %225 = sbr.rel (%p223) target = $region36
        $region35: #{tpu_custom_call.1} parent=31 // pred_region
          %vm226 = vcmask 523264
          %227 = vst.msk [vmem:[#allocation2] sm:$0xff] %vm226, 0.0
        $region36: #{tpu_custom_call.1} parent=31 // pred_fallthru
          _
        %v228 = vld [vmem:[%s209] sm:$0xff]
        %v229 = vld [vmem:[%s214] sm:$0xff]
        %v230 = vld [vmem:[%s214 + $0x8] sm:$0xff]
        %v231 = vld [vmem:[%s214 + $0x10] sm:$0xff]
        %v232 = vld [vmem:[%s214 + $0x18] sm:$0xff]
        %v233 = vld [vmem:[%s214 + $0x20] sm:$0xff]
        %v234 = vld [vmem:[%s214 + $0x28] sm:$0xff]
        %v235 = vld [vmem:[%s214 + $0x30] sm:$0xff]
        %v236 = vld [vmem:[%s214 + $0x38] sm:$0xff]
        %v237 = vld [vmem:[%s214 + $0x40] sm:$0xff]
        %v238 = vld [vmem:[%s214 + $0x48] sm:$0xff]
        %v239 = vld [vmem:[%s214 + $0x50] sm:$0xff]
        %v240 = vld [vmem:[%s214 + $0x58] sm:$0xff]
        %v241 = vld [vmem:[%s214 + $0x60] sm:$0xff]
        %v242 = vld [vmem:[%s214 + $0x68] sm:$0xff]
        %v243 = vld [vmem:[%s214 + $0x70] sm:$0xff]
        %v244 = vld [vmem:[%s214 + $0x78] sm:$0xff]
        %vm245 = vcmask 523264
        %v247 = vsel %vm245, %v228, 0
        %249 = vmatprep.subr.mxu0 0.0
        %250 = vmatpush1.msra.mxu0 0.0
        %251 = vmatprep.subr.mxu0 0.0
        %252 = vmatpush1.msra.mxu0 0.0
        %253 = vmatprep.subr.mxu0 0.0
        %254 = vmatpush1.msra.mxu0 0.0
        %255 = vmatprep.subr.mxu0 0.0
        %256 = vmatpush1.msra.mxu0 0.0
        %257 = vmatprep.subr.mxu0 0.0
        %258 = vmatpush1.msra.mxu0 0.0
        %259 = vmatprep.subr.mxu0 0.0
        %260 = vmatpush1.msra.mxu0 0.0
        %261 = vmatprep.subr.mxu0 0.0
        %262 = vmatpush1.msra.mxu0 0.0
        %263 = vmatprep.subr.mxu0 0.0
        %264 = vmatpush1.msra.mxu0 0.0
        %265 = vmatprep.subr.mxu0 %v244
        %266 = vmatpush1.msra.mxu0 %v243
        %267 = vmatprep.subr.mxu0 %v242
        %268 = vmatpush1.msra.mxu0 %v241
        %269 = vmatprep.subr.mxu0 %v240
        %270 = vmatpush1.msra.mxu0 %v239
        %271 = vmatprep.subr.mxu0 %v238
        %272 = vmatpush1.msra.mxu0 %v237
        %273 = vmatprep.subr.mxu0 %v236
        %274 = vmatpush1.msra.mxu0 %v235
        %275 = vmatprep.subr.mxu0 %v234
        %276 = vmatpush1.msra.mxu0 %v233
        %277 = vmatprep.subr.mxu0 %v232
        %278 = vmatpush1.msra.mxu0 %v231
        %279 = vmatprep.subr.mxu0 %v230
        %280 = vmatpush1.msra.mxu0 %v229
        %281 = vmatprep.subr.mxu0 0.0
        %282 = vmatpush2.msra.mxu0 0.0
        %283 = vmatprep.subr.mxu0 0.0
        %284 = vmatpush2.msra.mxu0 0.0
        %285 = vmatprep.subr.mxu0 0.0
        %286 = vmatpush2.msra.mxu0 0.0
        %287 = vmatprep.subr.mxu0 0.0
        %288 = vmatpush2.msra.mxu0 0.0
        %289 = vmatprep.subr.mxu0 0.0
        %290 = vmatpush2.msra.mxu0 0.0
        %291 = vmatprep.subr.mxu0 0.0
        %292 = vmatpush2.msra.mxu0 0.0
        %293 = vmatprep.subr.mxu0 0.0
        %294 = vmatpush2.msra.mxu0 0.0
        %295 = vmatprep.subr.mxu0 0.0
        %296 = vmatpush2.msra.mxu0 0.0
        %297 = vmatprep.subr.mxu0 0.0
        %298 = vmatpush2.msra.mxu0 0.0
        %299 = vmatprep.subr.mxu0 0.0
        %300 = vmatpush2.msra.mxu0 0.0
        %301 = vmatprep.subr.mxu0 0.0
        %302 = vmatpush2.msra.mxu0 0.0
        %303 = vmatprep.subr.mxu0 0.0
        %304 = vmatpush2.msra.mxu0 0.0
        %305 = vmatprep.subr.mxu0 0.0
        %306 = vmatpush2.msra.mxu0 0.0
        %307 = vmatprep.subr.mxu0 0.0
        %308 = vmatpush2.msra.mxu0 0.0
        %309 = vmatprep.subr.mxu0 0.0
        %310 = vmatpush2.msra.mxu0 0.0
        %311 = vmatprep.subr.mxu0 0.0
        %312 = vmatpush2.msra.mxu0 0.0
        %313 = vmatprep.mubr.f32.mxu0 0.0
        %314 = vmatmul.mubr.f32.gmra.mxu0 %v247
        %v315 = vpop.f32.mrf.mxu0
        %v316 = vadd.f32 0.0, %v315
        %v317 = vpop.f32.mrf.mxu0
        %v318 = vadd.f32 0.0, %v317
        %319 = vdwg.mxu0
        %v320 = vxor.u32 %v316, 2147483648
        %v321 = vmul.f32 %v320, 1.442695
        %v322 = vpow.pop %v321
        %v323 = vadd.f32 %v322, 1.0
        %v324 = vrcp.pop %v323
        %v325 = vmul.f32 1.0, %v324
        %v326 = vmul.f32 %v316, %v325
        %v327 = vmul.f32 %v326, %v318
        %v328 = vld [vmem:[#allocation2] sm:$0xff]
        %v329 = vld [vmem:[%s220] sm:$0xff]
        %v330 = vld [vmem:[%s220 + $0x8] sm:$0xff]
        %v331 = vld [vmem:[%s220 + $0x10] sm:$0xff]
        %v332 = vld [vmem:[%s220 + $0x18] sm:$0xff]
        %v333 = vld [vmem:[%s220 + $0x20] sm:$0xff]
        %v334 = vld [vmem:[%s220 + $0x28] sm:$0xff]
        %v335 = vld [vmem:[%s220 + $0x30] sm:$0xff]
        %v336 = vld [vmem:[%s220 + $0x38] sm:$0xff]
        %v337 = vld [vmem:[%s220 + $0x40] sm:$0xff]
        %v338 = vld [vmem:[%s220 + $0x48] sm:$0xff]
        %v339 = vld [vmem:[%s220 + $0x50] sm:$0xff]
        %v340 = vld [vmem:[%s220 + $0x58] sm:$0xff]
        %v341 = vld [vmem:[%s220 + $0x60] sm:$0xff]
        %v342 = vld [vmem:[%s220 + $0x68] sm:$0xff]
        %v343 = vld [vmem:[%s220 + $0x70] sm:$0xff]
        %v344 = vld [vmem:[%s220 + $0x78] sm:$0xff]
        %345 = vmatprep.subr.mxu0 0.0
        %346 = vmatpush1.msra.mxu0 %v344
        %347 = vmatprep.subr.mxu0 0.0
        %348 = vmatpush1.msra.mxu0 %v343
        %349 = vmatprep.subr.mxu0 0.0
        %350 = vmatpush1.msra.mxu0 %v342
        %351 = vmatprep.subr.mxu0 0.0
        %352 = vmatpush1.msra.mxu0 %v341
        %353 = vmatprep.subr.mxu0 0.0
        %354 = vmatpush1.msra.mxu0 %v340
        %355 = vmatprep.subr.mxu0 0.0
        %356 = vmatpush1.msra.mxu0 %v339
        %357 = vmatprep.subr.mxu0 0.0
        %358 = vmatpush1.msra.mxu0 %v338
        %359 = vmatprep.subr.mxu0 0.0
        %360 = vmatpush1.msra.mxu0 %v337
        %361 = vmatprep.subr.mxu0 0.0
        %362 = vmatpush1.msra.mxu0 %v336
        %363 = vmatprep.subr.mxu0 0.0
        %364 = vmatpush1.msra.mxu0 %v335
        %365 = vmatprep.subr.mxu0 0.0
        %366 = vmatpush1.msra.mxu0 %v334
        %367 = vmatprep.subr.mxu0 0.0
        %368 = vmatpush1.msra.mxu0 %v333
        %369 = vmatprep.subr.mxu0 0.0
        %370 = vmatpush1.msra.mxu0 %v332
        %371 = vmatprep.subr.mxu0 0.0
        %372 = vmatpush1.msra.mxu0 %v331
        %373 = vmatprep.subr.mxu0 0.0
        %374 = vmatpush1.msra.mxu0 %v330
        %375 = vmatprep.subr.mxu0 0.0
        %376 = vmatpush1.msra.mxu0 %v329
        %377 = vmatprep.subr.mxu0 0.0
        %378 = vmatpush2.msra.mxu0 0.0
        %379 = vmatprep.subr.mxu0 0.0
        %380 = vmatpush2.msra.mxu0 0.0
        %381 = vmatprep.subr.mxu0 0.0
        %382 = vmatpush2.msra.mxu0 0.0
        %383 = vmatprep.subr.mxu0 0.0
        %384 = vmatpush2.msra.mxu0 0.0
        %385 = vmatprep.subr.mxu0 0.0
        %386 = vmatpush2.msra.mxu0 0.0
        %387 = vmatprep.subr.mxu0 0.0
        %388 = vmatpush2.msra.mxu0 0.0
        %389 = vmatprep.subr.mxu0 0.0
        %390 = vmatpush2.msra.mxu0 0.0
        %391 = vmatprep.subr.mxu0 0.0
        %392 = vmatpush2.msra.mxu0 0.0
        %393 = vmatprep.subr.mxu0 0.0
        %394 = vmatpush2.msra.mxu0 0.0
        %395 = vmatprep.subr.mxu0 0.0
        %396 = vmatpush2.msra.mxu0 0.0
        %397 = vmatprep.subr.mxu0 0.0
        %398 = vmatpush2.msra.mxu0 0.0
        %399 = vmatprep.subr.mxu0 0.0
        %400 = vmatpush2.msra.mxu0 0.0
        %401 = vmatprep.subr.mxu0 0.0
        %402 = vmatpush2.msra.mxu0 0.0
        %403 = vmatprep.subr.mxu0 0.0
        %404 = vmatpush2.msra.mxu0 0.0
        %405 = vmatprep.subr.mxu0 0.0
        %406 = vmatpush2.msra.mxu0 0.0
        %407 = vmatprep.subr.mxu0 0.0
        %408 = vmatpush2.msra.mxu0 0.0
        %409 = vmatprep.mubr.f32.mxu0 0.0
        %410 = vmatmul.mubr.f32.gmra.mxu0 %v327
        %v411 = vpop.f32.mrf.mxu0
        %v412 = vadd.f32 0.0, %v411
        %v413 = vpop.f32.mrf.mxu0
        %414 = vdwg.mxu0
        %v415 = vadd.f32 %v328, %v412
        %416 = vst.msk [vmem:[#allocation2] sm:$0xff] %vm245, %v415
        // Predicated region
        $region37: #{tpu_custom_call.1} parent=31 // pred_check
          %p417 = pneg %p222
        $region38: #{tpu_custom_call.1} parent=31 // pred_check_branch
          %419 = sbr.rel (%p417) target = $region40
        $region39: #{tpu_custom_call.1} parent=31 // pred_region
          %v420 = vld [vmem:[#allocation2] sm:$0xff]
          %421 = vst.msk [vmem:[%s205] sm:$0xff] %vm245, %v420
        $region40: #{tpu_custom_call.1} parent=31 // pred_fallthru
          _
        %s422 = sand.u32 %s115, 1
        %s423 = scalar_lea.sflag [#allocation4], %s422
        %s424 = sand.u32 %s115, 1
        %s425 = smul.addr %s424, 8
        %s426 = scalar_lea.vmem [#allocation3], %s425
        // Predicated region
        $region41: #{tpu_custom_call.1} parent=31 // pred_check
          %p427 = pneg %p125
        $region42: #{tpu_custom_call.1} parent=31 // pred_check_branch
          %429 = sbr.rel (%p427) target = $region44
        $region43: #{tpu_custom_call.1} parent=31 // pred_region
          %s431 = ssub.s32 128, 128
          %432 = vsyncadd %s423, %s431
          %s433 = smul.addr %s21, 128
          %s434 = scalar_lea.hbm %s3, %s433
          %s436 = sshll.u32 %s426, 4
          %s437 = int_to_ptr.vmem [resolvable:$true] %s436
          %439 = dma.vmem_to_hbm [thread:$0]  %s437, 128, %s434, %s423
        $region44: #{tpu_custom_call.1} parent=31 // pred_fallthru
          _
      $region32: #{tpu_custom_call.1} parent=5 // pred_fallthru
        _
      %p440 = scmp.le.s32.totalorder 2, %s12
      // Predicated region
      $region45: #{tpu_custom_call.1} parent=5 // pred_check
        %p441 = pneg %p440
      $region46: #{tpu_custom_call.1} parent=5 // pred_check_branch
        %443 = sbr.rel (%p441) target = $region48
      $region47: #{tpu_custom_call.1} parent=5 // pred_region
        %s444 = ssub.s32 %s12, 2
        // Predicated region
        $region49: #{tpu_custom_call.1} parent=47 // pred_check
          %p445 = pneg %p131
        $region50: #{tpu_custom_call.1} parent=47 // pred_check_branch
          %447 = sbr.rel (%p445) target = $region52
        $region51: #{tpu_custom_call.1} parent=47 // pred_region
          %s448 = sand.u32 %s116, 1
          %s449 = scalar_lea.sflag [#allocation4], %s448
          %s450 = sand.u32 %s116, 1
          %s451 = smul.addr %s450, 8
          %s452 = scalar_lea.vmem [#allocation3], %s451
          %453 = dma.done %s449, 128
        $region52: #{tpu_custom_call.1} parent=47 // pred_fallthru
          _
      $region48: #{tpu_custom_call.1} parent=5 // pred_fallthru
        _
    $region6: #{tpu_custom_call.1} parent=1 // loop_footer
      %s16 = sadd.s32 1, %s12
    $region7: #{tpu_custom_call.1} parent=1 // loop_footer_branch
      %11 = sbr.rel target = $region3
    $region8: #{tpu_custom_call.1} parent=1 // loop_exit
      _
    %454 = vsyncpa [#allocation4], 1
    %s455 = scalar_lea.sflag [#allocation4], 1
    %456 = vsyncpa %s455, 1

</llo_original>
